<compile_context>
chip_gen: v6e
topology: v6e:2x2x1
jax: 0.10.0
libtpu: 0.0.40
codegen_flags: <defaults>
</compile_context>

<pallas_src>
import functools

import jax
import jax.numpy as jnp
from jax.experimental import pallas as pl
from jax.experimental.pallas import tpu as pltpu


def _round_up(v, m):
    return ((v + m - 1) // m) * m


def _vmem_budget_bytes():
    """Generation-aware VMEM request: ~3/4 of physical, capped at 100 MiB."""
    cap = 64 * 1024 * 1024                      # conservative default (v7x per-TC)
    try:
        info = pltpu.get_tpu_info()
        cap = int(getattr(info, "vmem_capacity_bytes", cap) or cap)
    except Exception:
        pass
    return min((cap * 3) // 4, 100 * 1024 * 1024)


def _gcn_block_kernel(adj_ref, feat_ref, drow_ref, *rest,
                      apply_w, use_relu, feat_resident, tk):
    if apply_w:
        w_ref, scale_ref, shift_ref, o_ref, acc_ref = rest
    else:
        scale_ref, shift_ref, o_ref, acc_ref = rest
        w_ref = None

    k = pl.program_id(1)

    @pl.when(k == 0)
    def _init():
        acc_ref[...] = jnp.zeros_like(acc_ref)

    # Propagation against the raw adjacency tile (self-loop already folded into
    # its diagonal).  Column normalization d_j is pre-folded into the feature
    # rows; the row normalization d_i is applied once in the epilogue.
    if feat_resident:
        off = pl.multiple_of(k * tk, 128)
        feat_tile = feat_ref[pl.ds(off, tk), :]        # VMEM-resident feature slab
    else:
        feat_tile = feat_ref[...]                      # streamed (tk, F_mid) block
    acc_ref[...] += jnp.dot(adj_ref[...], feat_tile,
                            preferred_element_type=jnp.float32)

    @pl.when(k == pl.num_programs(1) - 1)
    def _finish():
        prop = acc_ref[...] * drow_ref[...]            # row scale d_i, (tm,1) bcast
        if apply_w:
            # Epilogue matmul kept in f32: no downcast of the accumulated prop.
            out = jnp.dot(prop, w_ref[...], preferred_element_type=jnp.float32)
        else:
            out = prop                                 # X @ W applied outside
        out = out * scale_ref[...] + shift_ref[...]    # fused conv-bias + BN(eval)
        if use_relu:
            out = jnp.maximum(out, 0.0)
        # Dropout in eval mode is the identity.
        # TODO(synk): training-mode dropout would need pltpu.prng_seed + stateful_bernoulli.
        o_ref[...] = out.astype(o_ref.dtype)


@functools.partial(jax.jit,
                   static_argnames=("add_self_loops", "use_relu",
                                    "compute_dtype", "tile"))
def gcn_block(x, adj, w, b, gamma, beta, running_mean, running_var, *,
              add_self_loops=True, use_relu=True,
              compute_dtype=jnp.bfloat16, tile=1024):
    """x: (N, F_in) node features; adj: (N, N) dense RAW adjacency (0/1 entries)."""
    f32 = jnp.float32
    cd = jnp.dtype(compute_dtype)
    x = x.astype(f32)
    adj = adj.astype(f32)
    w = w.astype(f32)

    N, F_in = x.shape
    F_out = w.shape[1]

    # ---- O(N) GCN normalization terms (A_hat is never materialized) ----
    deg = jnp.sum(adj, axis=1)
    if add_self_loops:
        deg = deg + 1.0
    d = jnp.where(deg > 0, jax.lax.rsqrt(deg), 0.0).astype(f32)          # (N,)

    # ---- fold conv bias + eval BatchNorm into a single scale/shift ----
    scale = (gamma * jax.lax.rsqrt(running_var + 1e-5)).astype(f32)      # (F_out,)
    shift = (beta + (b - running_mean) * scale).astype(f32)              # (F_out,)

    # ---- matmul order: contract the N^2 propagation against min(F_in, F_out) ----
    apply_w = F_in <= F_out
    feat_src = x if apply_w else (x @ w)          # tiny outside matmul otherwise
    F_mid = F_in if apply_w else F_out
    feat = (feat_src * d[:, None]).astype(cd)     # d_j pre-fold + cast to MXU dtype

    F_mid_pad = _round_up(F_mid, 128)
    F_pad = _round_up(F_out, 128)

    # ---- tile / residency plan against a generation-aware VMEM budget ----
    budget = _vmem_budget_bytes()

    def plan(t):
        n_pad = _round_up(N, t)
        for resident in (True, False):
            feat_bytes = (2 * n_pad * F_mid_pad * cd.itemsize if resident
                          else 2 * t * F_mid_pad * cd.itemsize)
            est = (2 * t * t * cd.itemsize                 # adj tile, double-buffered
                   + feat_bytes
                   + 2 * t * F_pad * 4                     # output tile
                   + t * F_mid_pad * 4                     # f32 accumulator scratch
                   + (2 * F_mid_pad * F_pad * 4 if apply_w else 0)
                   + 2 * (t + 2 * F_pad) * 4               # d / scale / shift
                   + (2 << 20))                            # slack
            if est <= budget:
                return n_pad, resident
        return None

    t = _round_up(min(tile, _round_up(N, 128)), 128)
    chosen = None
    while True:
        chosen = plan(t)
        if chosen is not None or t <= 128:
            break
        t = max(128, _round_up(t // 2, 128))
    if chosen is None:                                     # last resort: smallest, streamed
        t = 128
        chosen = (_round_up(N, t), False)
    tile = t
    N_pad, feat_resident = chosen
    tm = tk = tile
    grid = (N_pad // tm, N_pad // tk)

    # ---- single fused pad + cast pass; self-loop folded into the diagonal ----
    adj_c = adj.astype(cd)
    if N_pad != N:
        adj_p = jnp.zeros((N_pad, N_pad), cd).at[:N, :N].set(adj_c)
    else:
        adj_p = adj_c
    if add_self_loops:
        idx = jnp.arange(N)
        adj_p = adj_p.at[idx, idx].add(jnp.ones((N,), cd))

    if (N_pad, F_mid_pad) != feat.shape:
        feat_p = jnp.zeros((N_pad, F_mid_pad), cd).at[:N, :F_mid].set(feat)
    else:
        feat_p = feat

    d_p = jnp.zeros((N_pad, 1), f32).at[:N, 0].set(d)
    scale_p = jnp.zeros((1, F_pad), f32).at[0, :F_out].set(scale)
    shift_p = jnp.zeros((1, F_pad), f32).at[0, :F_out].set(shift)

    args = [adj_p, feat_p, d_p]
    in_specs = [
        pl.BlockSpec((tm, tk), lambda i, k: (i, k)),                   # adjacency tile
        (pl.BlockSpec((N_pad, F_mid_pad), lambda i, k: (0, 0))         # resident feat slab
         if feat_resident else
         pl.BlockSpec((tk, F_mid_pad), lambda i, k: (k, 0))),          # streamed feat tile
        pl.BlockSpec((tm, 1), lambda i, k: (i, 0)),                    # d_i row scale
    ]
    if apply_w:
        w_p = jnp.zeros((F_mid_pad, F_pad), f32).at[:F_in, :F_out].set(w)   # f32 epilogue W
        args.append(w_p)
        in_specs.append(pl.BlockSpec((F_mid_pad, F_pad), lambda i, k: (0, 0)))
    args += [scale_p, shift_p]
    in_specs += [pl.BlockSpec((1, F_pad), lambda i, k: (0, 0)),        # fused BN scale
                 pl.BlockSpec((1, F_pad), lambda i, k: (0, 0))]        # fused BN shift (+bias)

    kernel = functools.partial(_gcn_block_kernel,
                               apply_w=apply_w, use_relu=use_relu,
                               feat_resident=feat_resident, tk=tk)

    flops = 2 * N_pad * N_pad * F_mid_pad
    if apply_w:
        flops += 2 * N_pad * F_mid_pad * F_pad
    feat_passes = 1 if feat_resident else grid[0]
    bytes_accessed = (N_pad * N_pad * cd.itemsize
                      + N_pad * F_mid_pad * cd.itemsize * feat_passes
                      + (F_mid_pad * F_pad * 4 if apply_w else 0)
                      + N_pad * F_pad * 4)

    out = pl.pallas_call(
        kernel,
        out_shape=jax.ShapeDtypeStruct((N_pad, F_pad), f32),
        grid_spec=pltpu.PrefetchScalarGridSpec(
            num_scalar_prefetch=0,
            grid=grid,
            in_specs=in_specs,
            out_specs=pl.BlockSpec((tm, F_pad), lambda i, k: (i, 0)),
            scratch_shapes=[pltpu.VMEM((tm, F_mid_pad), jnp.float32)],
        ),
        compiler_params=pltpu.CompilerParams(
            # TODO(synk): on v7x, consider pltpu.CORE_PARALLEL on axis 0 to split
            # row tiles across the two TensorCores (kept "parallel" here for safety).
            dimension_semantics=("parallel", "arbitrary"),
            vmem_limit_bytes=int(budget),
        ),
        cost_estimate=pl.CostEstimate(flops=int(flops), transcendentals=0,
                                      bytes_accessed=int(bytes_accessed)),
    )(*args)

    return out[:N, :F_out]


def _reference(x, adj, w, b, gamma, beta, rm, rv, add_self_loops=True):
    N = x.shape[0]
    a = adj + (jnp.eye(N, dtype=adj.dtype) if add_self_loops else 0.0)
    deg = jnp.sum(a, axis=1)
    dis = jnp.where(deg > 0, 1.0 / jnp.sqrt(deg), 0.0)
    a_hat = a * dis[:, None] * dis[None, :]
    out = a_hat @ (x @ w) + b
    out = (out - rm) / jnp.sqrt(rv + 1e-5) * gamma + beta
    return jnp.maximum(out, 0.0)


if __name__ == "__main__":
    key = jax.random.PRNGKey(0)
    N, F_in, F_out = 16, 32, 64
    ks = jax.random.split(key, 10)

    x = jax.random.normal(ks[0], (N, F_in), dtype=jnp.float32)
    rand = jax.random.uniform(ks[1], (N, N))
    adj = (rand + rand.T > 1.0).astype(jnp.float32) * (1.0 - jnp.eye(N))

    w = jax.random.normal(ks[2], (F_in, F_out), dtype=jnp.float32) / jnp.sqrt(F_in)
    b = 0.1 * jax.random.normal(ks[3], (F_out,), dtype=jnp.float32)
    gamma = 1.0 + 0.1 * jax.random.normal(ks[4], (F_out,), dtype=jnp.float32)
    beta = 0.1 * jax.random.normal(ks[5], (F_out,), dtype=jnp.float32)
    rm = 0.05 * jax.random.normal(ks[6], (F_out,), dtype=jnp.float32)
    rv = 1.0 + 0.1 * jax.random.uniform(ks[7], (F_out,), dtype=jnp.float32)

    ref = _reference(x, adj, w, b, gamma, beta, rm, rv)

    # (1) Default config: bf16 adjacency/features on the MXU, f32 accumulation/epilogue.
    out_bf = jax.block_until_ready(gcn_block(x, adj, w, b, gamma, beta, rm, rv))
    assert out_bf.shape == (N, F_out)
    assert float(jnp.max(jnp.abs(out_bf - ref))) < 5e-2, "bf16 (default) path mismatch"

    # (2) f32 path, F_in < F_out -> (A_hat @ X) @ W done inside the kernel.
    out_f32 = jax.block_until_ready(
        gcn_block(x, adj, w, b, gamma, beta, rm, rv, compute_dtype=jnp.float32))
    assert float(jnp.max(jnp.abs(out_f32 - ref))) < 5e-4, "f32 path mismatch"

    # (3) F_in > F_out -> X @ W precomputed outside, kernel skips the inner W matmul.
    Fi2, Fo2 = F_out, F_in            # 64 -> 32
    x2 = jax.random.normal(ks[8], (N, Fi2), dtype=jnp.float32)
    w2 = jax.random.normal(ks[9], (Fi2, Fo2), dtype=jnp.float32) / jnp.sqrt(Fi2)
    b2 = 0.05 * jnp.ones((Fo2,), jnp.float32)
    g2 = jnp.ones((Fo2,), jnp.float32)
    be2 = jnp.zeros((Fo2,), jnp.float32)
    rm2 = jnp.zeros((Fo2,), jnp.float32)
    rv2 = jnp.ones((Fo2,), jnp.float32)
    ref2 = _reference(x2, adj, w2, b2, g2, be2, rm2, rv2)
    out2 = jax.block_until_ready(
        gcn_block(x2, adj, w2, b2, g2, be2, rm2, rv2, compute_dtype=jnp.float32))
    assert float(jnp.max(jnp.abs(out2 - ref2))) < 5e-4, "F_in>F_out path mismatch"

    print("KERNEL_OK")
</pallas_src>

<mosaic_0001>
module attributes {stable_mosaic.version = 11 : i64} {
  func.func @_gcn_block_kernel(%arg0: i32, %arg1: i32, %arg2: memref<128x128xbf16, #tpu.memory_space<vmem>>, %arg3: memref<128x128xbf16, #tpu.memory_space<vmem>>, %arg4: memref<128x1xf32, #tpu.memory_space<vmem>>, %arg5: memref<128x128xf32, #tpu.memory_space<vmem>>, %arg6: memref<1x128xf32, #tpu.memory_space<vmem>>, %arg7: memref<1x128xf32, #tpu.memory_space<vmem>>, %arg8: memref<128x128xf32, #tpu.memory_space<vmem>>, %arg9: memref<128x128xf32, #tpu.memory_space<vmem>>) attributes {dimension_semantics = [#tpu.dimension_semantics<parallel>, #tpu.dimension_semantics<arbitrary>], iteration_bounds = array<i64: 1, 1>, scalar_prefetch = 0 : i64, scratch_operands = 1 : i64, tpu.core_type = #tpu.core_type<tc>, window_params = [{transform_indices = @transform_0, window_bounds = array<i64: 128, 128>}, {pipeline_mode = #tpu.pipeline_mode<synchronous>, transform_indices = @transform_1, window_bounds = array<i64: 128, 128>}, {transform_indices = @transform_2, window_bounds = array<i64: 128, 1>}, {pipeline_mode = #tpu.pipeline_mode<synchronous>, transform_indices = @transform_3, window_bounds = array<i64: 128, 128>}, {pipeline_mode = #tpu.pipeline_mode<synchronous>, transform_indices = @transform_4, window_bounds = array<i64: 1, 128>}, {pipeline_mode = #tpu.pipeline_mode<synchronous>, transform_indices = @transform_5, window_bounds = array<i64: 1, 128>}, {transform_indices = @transform_6, window_bounds = array<i64: 128, 128>}]} {
    %c0_i32 = arith.constant 0 : i32
    %0 = arith.cmpi eq, %arg1, %c0_i32 : i32
    %1 = arith.extui %0 : i1 to i32
    %c0_i32_0 = arith.constant 0 : i32
    %2 = arith.cmpi ne, %1, %c0_i32_0 : i32
    scf.if %2 {
      %cst_9 = arith.constant 0.000000e+00 : f32
      %15 = vector.broadcast %cst_9 : f32 to vector<128x128xf32>
      %c0_10 = arith.constant 0 : index
      %c0_11 = arith.constant 0 : index
      %16 = vector.load %arg9[%c0_10, %c0_11] : memref<128x128xf32, #tpu.memory_space<vmem>>, vector<128x128xf32>
      tpu.vector_store %arg9[%c0_10, %c0_11], %15 {strides = array<i32>} : memref<128x128xf32, #tpu.memory_space<vmem>>, vector<128x128xf32>,
    } else {
    }
    %c128_i32 = arith.constant 128 : i32
    %3 = arith.muli %arg1, %c128_i32 : i32
    %4 = tpu.assume_multiple %3, 128 : i32
    %5 = arith.index_cast %4 : i32 to index
    %c0 = arith.constant 0 : index
    %6 = vector.load %arg3[%5, %c0] : memref<128x128xbf16, #tpu.memory_space<vmem>>, vector<128x128xbf16>
    %c0_1 = arith.constant 0 : index
    %c0_2 = arith.constant 0 : index
    %7 = vector.load %arg9[%c0_1, %c0_2] : memref<128x128xf32, #tpu.memory_space<vmem>>, vector<128x128xf32>
    %c0_3 = arith.constant 0 : index
    %c0_4 = arith.constant 0 : index
    %8 = vector.load %arg2[%c0_3, %c0_4] : memref<128x128xbf16, #tpu.memory_space<vmem>>, vector<128x128xbf16>
    %cst = arith.constant dense<0.000000e+00> : vector<128x128xf32>
    %9 = tpu.matmul %8, %6, %cst {dimension_numbers = #tpu.dot_dimension_numbers<[1], [0], [0], [1], [0, 0, 1, 1], [], []>} : vector<128x128xbf16>, vector<128x128xbf16>, vector<128x128xf32> -> vector<128x128xf32>
    %10 = arith.addf %7, %9 : vector<128x128xf32>
    %c0_5 = arith.constant 0 : index
    %c0_6 = arith.constant 0 : index
    %11 = vector.load %arg9[%c0_5, %c0_6] : memref<128x128xf32, #tpu.memory_space<vmem>>, vector<128x128xf32>
    tpu.vector_store %arg9[%c0_5, %c0_6], %10 {strides = array<i32>} : memref<128x128xf32, #tpu.memory_space<vmem>>, vector<128x128xf32>,
    %c0_i32_7 = arith.constant 0 : i32
    %12 = arith.cmpi eq, %arg1, %c0_i32_7 : i32
    %13 = arith.extui %12 : i1 to i32
    %c0_i32_8 = arith.constant 0 : i32
    %14 = arith.cmpi ne, %13, %c0_i32_8 : i32
    scf.if %14 {
      %c0_9 = arith.constant 0 : index
      %c0_10 = arith.constant 0 : index
      %15 = vector.load %arg9[%c0_9, %c0_10] : memref<128x128xf32, #tpu.memory_space<vmem>>, vector<128x128xf32>
      %c0_11 = arith.constant 0 : index
      %c0_12 = arith.constant 0 : index
      %16 = vector.load %arg4[%c0_11, %c0_12] : memref<128x1xf32, #tpu.memory_space<vmem>>, vector<128x1xf32>
      %17 = vector.broadcast %16 : vector<128x1xf32> to vector<128x128xf32>
      %18 = arith.mulf %15, %17 : vector<128x128xf32>
      %c0_13 = arith.constant 0 : index
      %c0_14 = arith.constant 0 : index
      %19 = vector.load %arg5[%c0_13, %c0_14] : memref<128x128xf32, #tpu.memory_space<vmem>>, vector<128x128xf32>
      %cst_15 = arith.constant dense<0.000000e+00> : vector<128x128xf32>
      %20 = tpu.matmul %18, %19, %cst_15 {dimension_numbers = #tpu.dot_dimension_numbers<[1], [0], [0], [1], [0, 0, 1, 1], [], []>} : vector<128x128xf32>, vector<128x128xf32>, vector<128x128xf32> -> vector<128x128xf32>
      %c0_16 = arith.constant 0 : index
      %c0_17 = arith.constant 0 : index
      %21 = vector.load %arg6[%c0_16, %c0_17] : memref<1x128xf32, #tpu.memory_space<vmem>>, vector<1x128xf32>
      %22 = vector.broadcast %21 : vector<1x128xf32> to vector<128x128xf32>
      %23 = arith.mulf %20, %22 : vector<128x128xf32>
      %c0_18 = arith.constant 0 : index
      %c0_19 = arith.constant 0 : index
      %24 = vector.load %arg7[%c0_18, %c0_19] : memref<1x128xf32, #tpu.memory_space<vmem>>, vector<1x128xf32>
      %25 = vector.broadcast %24 : vector<1x128xf32> to vector<128x128xf32>
      %26 = arith.addf %23, %25 : vector<128x128xf32>
      %cst_20 = arith.constant 0.000000e+00 : f32
      %27 = vector.broadcast %cst_20 : f32 to vector<128x128xf32>
      %28 = arith.maximumf %26, %27 : vector<128x128xf32>
      %c0_21 = arith.constant 0 : index
      %c0_22 = arith.constant 0 : index
      %29 = vector.load %arg8[%c0_21, %c0_22] : memref<128x128xf32, #tpu.memory_space<vmem>>, vector<128x128xf32>
      tpu.vector_store %arg8[%c0_21, %c0_22], %28 {strides = array<i32>} : memref<128x128xf32, #tpu.memory_space<vmem>>, vector<128x128xf32>,
    } else {
    }
    return
  }
  func.func @transform_0(%arg0: i32, %arg1: i32) -> (i32, i32) {
    %c0_i32 = arith.constant 0 : i32
    return %arg0, %arg1 : i32, i32
  }
  func.func @transform_1(%arg0: i32, %arg1: i32) -> (i32, i32) {
    %c0_i32 = arith.constant 0 : i32
    %c0_i32_0 = arith.constant 0 : i32
    %c0_i32_1 = arith.constant 0 : i32
    return %c0_i32, %c0_i32_0 : i32, i32
  }
  func.func @transform_2(%arg0: i32, %arg1: i32) -> (i32, i32) {
    %c0_i32 = arith.constant 0 : i32
    %c0_i32_0 = arith.constant 0 : i32
    return %arg0, %c0_i32 : i32, i32
  }
  func.func @transform_3(%arg0: i32, %arg1: i32) -> (i32, i32) {
    %c0_i32 = arith.constant 0 : i32
    %c0_i32_0 = arith.constant 0 : i32
    %c0_i32_1 = arith.constant 0 : i32
    return %c0_i32, %c0_i32_0 : i32, i32
  }
  func.func @transform_4(%arg0: i32, %arg1: i32) -> (i32, i32) {
    %c0_i32 = arith.constant 0 : i32
    %c0_i32_0 = arith.constant 0 : i32
    %c0_i32_1 = arith.constant 0 : i32
    return %c0_i32, %c0_i32_0 : i32, i32
  }
  func.func @transform_5(%arg0: i32, %arg1: i32) -> (i32, i32) {
    %c0_i32 = arith.constant 0 : i32
    %c0_i32_0 = arith.constant 0 : i32
    %c0_i32_1 = arith.constant 0 : i32
    return %c0_i32, %c0_i32_0 : i32, i32
  }
  func.func @transform_6(%arg0: i32, %arg1: i32) -> (i32, i32) {
    %c0_i32 = arith.constant 0 : i32
    %c0_i32_0 = arith.constant 0 : i32
    return %arg0, %c0_i32 : i32, i32
  }
}

</mosaic_0001>

<llo_original>
// kernel: gcn_block.1
$region0: #{gcn_block.1}
  #allocation0 [shape = 'u32[]', space=smem, size = 0x4, offset = 0x4, fixed_abs, tag = 'smem constant byte address 0x4 - core index']
  #allocation1 [shape = 'u32[144,128]{1,0:T(1,128)}', space=vmem, size = 0x12000, scoped, tag = 'internal scratch']
  #allocation2 [shape = 'f32[128,128]{1,0:T(8,128)}', space=vmem, size = 0x10000, scoped, tag = 'scratch operand']
  %s0 = inlined_call_operand.vmem [shape: bf16[128,128], index: 0, kind: input, shape index: {}]
  %s1 = inlined_call_operand.vmem [shape: bf16[128,128], index: 1, kind: input, shape index: {}]
  %s2 = inlined_call_operand.vmem [shape: f32[128,1], index: 2, kind: input, shape index: {}]
  %s3 = inlined_call_operand.vmem [shape: f32[128,128], index: 3, kind: input, shape index: {}]
  %s4 = inlined_call_operand.vmem [shape: f32[1,128], index: 4, kind: input, shape index: {}]
  %s5 = inlined_call_operand.vmem [shape: f32[1,128], index: 5, kind: input, shape index: {}]
  %s6 = inlined_call_operand.vmem [shape: f32[128,128], index: 6, kind: output, shape index: {}]
  %s7 = sld [smem:[#allocation0]]
  $region42: #{gcn_block.1} parent=0
    _
  %s9 = ssub.s32 1, %s7
  %s10 = scalar_select 0, %s9, %s7
  // Predicated region
  $region2: #{gcn_block.1} parent=0 // pred_check
    _
  $region3: #{gcn_block.1} parent=0 // pred_check_branch
    %12 = sbr.rel (0) target = $region5
  $region4: #{gcn_block.1} parent=0 // pred_region
    _
  $region5: #{gcn_block.1} parent=0 // pred_fallthru
    _
  // Predicated region
  $region6: #{gcn_block.1} parent=0 // pred_check
    _
  $region7: #{gcn_block.1} parent=0 // pred_check_branch
    %14 = sbr.rel (0) target = $region9
  $region8: #{gcn_block.1} parent=0 // pred_region
    _
  $region9: #{gcn_block.1} parent=0 // pred_fallthru
    _
  // Predicated region
  $region10: #{gcn_block.1} parent=0 // pred_check
    _
  $region11: #{gcn_block.1} parent=0 // pred_check_branch
    %16 = sbr.rel (0) target = $region13
  $region12: #{gcn_block.1} parent=0 // pred_region
    _
  $region13: #{gcn_block.1} parent=0 // pred_fallthru
    _
  // Predicated region
  $region14: #{gcn_block.1} parent=0 // pred_check
    _
  $region15: #{gcn_block.1} parent=0 // pred_check_branch
    %18 = sbr.rel (0) target = $region17
  $region16: #{gcn_block.1} parent=0 // pred_region
    _
  $region17: #{gcn_block.1} parent=0 // pred_fallthru
    _
  // Predicated region
  $region18: #{gcn_block.1} parent=0 // pred_check
    _
  $region19: #{gcn_block.1} parent=0 // pred_check_branch
    %20 = sbr.rel (0) target = $region21
  $region20: #{gcn_block.1} parent=0 // pred_region
    _
  $region21: #{gcn_block.1} parent=0 // pred_fallthru
    _
  // Predicated region
  $region22: #{gcn_block.1} parent=0 // pred_check
    _
  $region23: #{gcn_block.1} parent=0 // pred_check_branch
    %22 = sbr.rel (0) target = $region25
  $region24: #{gcn_block.1} parent=0 // pred_region
    _
  $region25: #{gcn_block.1} parent=0 // pred_fallthru
    _
  %p24 = scmp.eq.s32.totalorder 0, 0
  // Predicated region
  $region26: #{gcn_block.1} parent=0 // pred_check
    %p25 = pneg %p24
  $region27: #{gcn_block.1} parent=0 // pred_check_branch
    %27 = sbr.rel (%p25) target = $region29
  $region28: #{gcn_block.1} parent=0 // pred_region
    %28 = vst [vmem:[#allocation2] sm:$0xff] 0.0
    %29 = vst [vmem:[#allocation2 + $0x8] sm:$0xff] 0.0
    %30 = vst [vmem:[#allocation2 + $0x10] sm:$0xff] 0.0
    %31 = vst [vmem:[#allocation2 + $0x18] sm:$0xff] 0.0
    %32 = vst [vmem:[#allocation2 + $0x20] sm:$0xff] 0.0
    %33 = vst [vmem:[#allocation2 + $0x28] sm:$0xff] 0.0
    %34 = vst [vmem:[#allocation2 + $0x30] sm:$0xff] 0.0
    %35 = vst [vmem:[#allocation2 + $0x38] sm:$0xff] 0.0
    %36 = vst [vmem:[#allocation2 + $0x40] sm:$0xff] 0.0
    %37 = vst [vmem:[#allocation2 + $0x48] sm:$0xff] 0.0
    %38 = vst [vmem:[#allocation2 + $0x50] sm:$0xff] 0.0
    %39 = vst [vmem:[#allocation2 + $0x58] sm:$0xff] 0.0
    %40 = vst [vmem:[#allocation2 + $0x60] sm:$0xff] 0.0
    %41 = vst [vmem:[#allocation2 + $0x68] sm:$0xff] 0.0
    %42 = vst [vmem:[#allocation2 + $0x70] sm:$0xff] 0.0
    %43 = vst [vmem:[#allocation2 + $0x78] sm:$0xff] 0.0
  $region29: #{gcn_block.1} parent=0 // pred_fallthru
    _
  %s44 = smul.u32 0, 128
  %s45 = sshra.s32 %s44, 3
  %s46 = sand.u32 %s44, 7
  %s47 = smul.addr %s45, 4
  %s48 = scalar_lea.vmem %s1, %s47
  %v49 = vld [vmem:[%s48] sm:$0xf]
  %v50 = vld [vmem:[%s48 + $0x4] sm:$0xf]
  %v51 = vld [vmem:[%s48 + $0x8] sm:$0xf]
  %v52 = vld [vmem:[%s48 + $0xc] sm:$0xf]
  %v53 = vld [vmem:[%s48 + $0x10] sm:$0xf]
  %v54 = vld [vmem:[%s48 + $0x14] sm:$0xf]
  %v55 = vld [vmem:[%s48 + $0x18] sm:$0xf]
  %v56 = vld [vmem:[%s48 + $0x1c] sm:$0xf]
  %v57 = vld [vmem:[%s48 + $0x20] sm:$0xf]
  %v58 = vld [vmem:[%s48 + $0x24] sm:$0xf]
  %v59 = vld [vmem:[%s48 + $0x28] sm:$0xf]
  %v60 = vld [vmem:[%s48 + $0x2c] sm:$0xf]
  %v61 = vld [vmem:[%s48 + $0x30] sm:$0xf]
  %v62 = vld [vmem:[%s48 + $0x34] sm:$0xf]
  %v63 = vld [vmem:[%s48 + $0x38] sm:$0xf]
  %v64 = vld [vmem:[%s48 + $0x3c] sm:$0xf]
  %v65 = vld [vmem:[#allocation2] sm:$0xff]
  %v66 = vld [vmem:[#allocation2 + $0x8] sm:$0xff]
  %v67 = vld [vmem:[#allocation2 + $0x10] sm:$0xff]
  %v68 = vld [vmem:[#allocation2 + $0x18] sm:$0xff]
  %v69 = vld [vmem:[#allocation2 + $0x20] sm:$0xff]
  %v70 = vld [vmem:[#allocation2 + $0x28] sm:$0xff]
  %v71 = vld [vmem:[#allocation2 + $0x30] sm:$0xff]
  %v72 = vld [vmem:[#allocation2 + $0x38] sm:$0xff]
  %v73 = vld [vmem:[#allocation2 + $0x40] sm:$0xff]
  %v74 = vld [vmem:[#allocation2 + $0x48] sm:$0xff]
  %v75 = vld [vmem:[#allocation2 + $0x50] sm:$0xff]
  %v76 = vld [vmem:[#allocation2 + $0x58] sm:$0xff]
  %v77 = vld [vmem:[#allocation2 + $0x60] sm:$0xff]
  %v78 = vld [vmem:[#allocation2 + $0x68] sm:$0xff]
  %v79 = vld [vmem:[#allocation2 + $0x70] sm:$0xff]
  %v80 = vld [vmem:[#allocation2 + $0x78] sm:$0xff]
  %v81 = vld [vmem:[%s0] sm:$0xf]
  %v82 = vld [vmem:[%s0 + $0x4] sm:$0xf]
  %v83 = vld [vmem:[%s0 + $0x8] sm:$0xf]
  %v84 = vld [vmem:[%s0 + $0xc] sm:$0xf]
  %v85 = vld [vmem:[%s0 + $0x10] sm:$0xf]
  %v86 = vld [vmem:[%s0 + $0x14] sm:$0xf]
  %v87 = vld [vmem:[%s0 + $0x18] sm:$0xf]
  %v88 = vld [vmem:[%s0 + $0x1c] sm:$0xf]
  %v89 = vld [vmem:[%s0 + $0x20] sm:$0xf]
  %v90 = vld [vmem:[%s0 + $0x24] sm:$0xf]
  %v91 = vld [vmem:[%s0 + $0x28] sm:$0xf]
  %v92 = vld [vmem:[%s0 + $0x2c] sm:$0xf]
  %v93 = vld [vmem:[%s0 + $0x30] sm:$0xf]
  %v94 = vld [vmem:[%s0 + $0x34] sm:$0xf]
  %v95 = vld [vmem:[%s0 + $0x38] sm:$0xf]
  %v96 = vld [vmem:[%s0 + $0x3c] sm:$0xf]
  %v113 = vunpack.c.l.b16 %v81
  %v114 = vunpack.c.l.b16 %v82
  %v115 = vunpack.c.l.b16 %v83
  %v116 = vunpack.c.l.b16 %v84
  %v117 = vunpack.c.l.b16 %v85
  %v118 = vunpack.c.l.b16 %v86
  %v119 = vunpack.c.l.b16 %v87
  %v120 = vunpack.c.l.b16 %v88
  %v121 = vunpack.c.l.b16 %v89
  %v122 = vunpack.c.l.b16 %v90
  %v123 = vunpack.c.l.b16 %v91
  %v124 = vunpack.c.l.b16 %v92
  %v125 = vunpack.c.l.b16 %v93
  %v126 = vunpack.c.l.b16 %v94
  %v127 = vunpack.c.l.b16 %v95
  %v128 = vunpack.c.l.b16 %v96
  %v129 = vpack.c.b16 %v114, %v113
  %v130 = vpack.c.b16 %v116, %v115
  %v131 = vpack.c.b16 %v118, %v117
  %v132 = vpack.c.b16 %v120, %v119
  %v133 = vpack.c.b16 %v122, %v121
  %v134 = vpack.c.b16 %v124, %v123
  %v135 = vpack.c.b16 %v126, %v125
  %v136 = vpack.c.b16 %v128, %v127
  %v161 = vunpack.c.l.b16 %v49
  %v162 = vunpack.c.l.b16 %v50
  %v163 = vunpack.c.l.b16 %v51
  %v164 = vunpack.c.l.b16 %v52
  %v165 = vunpack.c.l.b16 %v53
  %v166 = vunpack.c.l.b16 %v54
  %v167 = vunpack.c.l.b16 %v55
  %v168 = vunpack.c.l.b16 %v56
  %v169 = vunpack.c.l.b16 %v57
  %v170 = vunpack.c.l.b16 %v58
  %v171 = vunpack.c.l.b16 %v59
  %v172 = vunpack.c.l.b16 %v60
  %v173 = vunpack.c.l.b16 %v61
  %v174 = vunpack.c.l.b16 %v62
  %v175 = vunpack.c.l.b16 %v63
  %v176 = vunpack.c.l.b16 %v64
  %v177 = vpack.c.b16 %v162, %v161
  %v178 = vpack.c.b16 %v164, %v163
  %v179 = vpack.c.b16 %v166, %v165
  %v180 = vpack.c.b16 %v168, %v167
  %v181 = vpack.c.b16 %v170, %v169
  %v182 = vpack.c.b16 %v172, %v171
  %v183 = vpack.c.b16 %v174, %v173
  %v184 = vpack.c.b16 %v176, %v175
  %193 = vmatprep.subr.bf16.mxu0 0
  %194 = vmatpush1.bf16.msra.mxu0 %v184
  %195 = vmatprep.subr.bf16.mxu0 0
  %196 = vmatpush1.bf16.msra.mxu0 %v183
  %197 = vmatprep.subr.bf16.mxu0 0
  %198 = vmatpush1.bf16.msra.mxu0 %v182
  %199 = vmatprep.subr.bf16.mxu0 0
  %200 = vmatpush1.bf16.msra.mxu0 %v181
  %201 = vmatprep.subr.bf16.mxu0 0
  %202 = vmatpush1.bf16.msra.mxu0 %v180
  %203 = vmatprep.subr.bf16.mxu0 0
  %204 = vmatpush1.bf16.msra.mxu0 %v179
  %205 = vmatprep.subr.bf16.mxu0 0
  %206 = vmatpush1.bf16.msra.mxu0 %v178
  %207 = vmatprep.subr.bf16.mxu0 0
  %208 = vmatpush1.bf16.msra.mxu0 %v177
  %209 = vmatprep.subr.bf16.mxu0 0
  %210 = vmatpush2.bf16.msra.mxu0 0
  %211 = vmatprep.subr.bf16.mxu0 0
  %212 = vmatpush2.bf16.msra.mxu0 0
  %213 = vmatprep.subr.bf16.mxu0 0
  %214 = vmatpush2.bf16.msra.mxu0 0
  %215 = vmatprep.subr.bf16.mxu0 0
  %216 = vmatpush2.bf16.msra.mxu0 0
  %217 = vmatprep.subr.bf16.mxu0 0
  %218 = vmatpush2.bf16.msra.mxu0 0
  %219 = vmatprep.subr.bf16.mxu0 0
  %220 = vmatpush2.bf16.msra.mxu0 0
  %221 = vmatprep.subr.bf16.mxu0 0
  %222 = vmatpush2.bf16.msra.mxu0 0
  %223 = vmatprep.subr.bf16.mxu0 0
  %224 = vmatpush2.bf16.msra.mxu0 0
  %225 = vmatprep.mubr.bf16.mxu0 0
  %226 = vmatmul.mubr.bf16.gmra.mxu0 %v129
  %v227 = vpop.f32.mrf.mxu0
  %v228 = vadd.f32 0.0, %v227
  %v229 = vpop.f32.mrf.mxu0
  %v230 = vpop.f32.mrf.mxu0
  %v231 = vadd.f32 0.0, %v230
  %v232 = vpop.f32.mrf.mxu0
  %233 = vmatprep.mubr.bf16.mxu0 0
  %234 = vmatmul.mubr.bf16.gmra.mxu0 %v130
  %v235 = vpop.f32.mrf.mxu0
  %v236 = vadd.f32 0.0, %v235
  %v237 = vpop.f32.mrf.mxu0
  %v238 = vpop.f32.mrf.mxu0
  %v239 = vadd.f32 0.0, %v238
  %v240 = vpop.f32.mrf.mxu0
  %241 = vmatprep.mubr.bf16.mxu0 0
  %242 = vmatmul.mubr.bf16.gmra.mxu0 %v131
  %v243 = vpop.f32.mrf.mxu0
  %v244 = vadd.f32 0.0, %v243
  %v245 = vpop.f32.mrf.mxu0
  %v246 = vpop.f32.mrf.mxu0
  %v247 = vadd.f32 0.0, %v246
  %v248 = vpop.f32.mrf.mxu0
  %249 = vmatprep.mubr.bf16.mxu0 0
  %250 = vmatmul.mubr.bf16.gmra.mxu0 %v132
  %v251 = vpop.f32.mrf.mxu0
  %v252 = vadd.f32 0.0, %v251
  %v253 = vpop.f32.mrf.mxu0
  %v254 = vpop.f32.mrf.mxu0
  %v255 = vadd.f32 0.0, %v254
  %v256 = vpop.f32.mrf.mxu0
  %257 = vmatprep.mubr.bf16.mxu0 0
  %258 = vmatmul.mubr.bf16.gmra.mxu0 %v133
  %v259 = vpop.f32.mrf.mxu0
  %v260 = vadd.f32 0.0, %v259
  %v261 = vpop.f32.mrf.mxu0
  %v262 = vpop.f32.mrf.mxu0
  %v263 = vadd.f32 0.0, %v262
  %v264 = vpop.f32.mrf.mxu0
  %265 = vmatprep.mubr.bf16.mxu0 0
  %266 = vmatmul.mubr.bf16.gmra.mxu0 %v134
  %v267 = vpop.f32.mrf.mxu0
  %v268 = vadd.f32 0.0, %v267
  %v269 = vpop.f32.mrf.mxu0
  %v270 = vpop.f32.mrf.mxu0
  %v271 = vadd.f32 0.0, %v270
  %v272 = vpop.f32.mrf.mxu0
  %273 = vmatprep.mubr.bf16.mxu0 0
  %274 = vmatmul.mubr.bf16.gmra.mxu0 %v135
  %v275 = vpop.f32.mrf.mxu0
  %v276 = vadd.f32 0.0, %v275
  %v277 = vpop.f32.mrf.mxu0
  %v278 = vpop.f32.mrf.mxu0
  %v279 = vadd.f32 0.0, %v278
  %v280 = vpop.f32.mrf.mxu0
  %281 = vmatprep.mubr.bf16.mxu0 0
  %282 = vmatmul.mubr.bf16.gmra.mxu0 %v136
  %v283 = vpop.f32.mrf.mxu0
  %v284 = vadd.f32 0.0, %v283
  %v285 = vpop.f32.mrf.mxu0
  %v286 = vpop.f32.mrf.mxu0
  %v287 = vadd.f32 0.0, %v286
  %v288 = vpop.f32.mrf.mxu0
  %289 = vdwg.mxu0
  %v290 = vadd.f32 %v65, %v228
  %v291 = vadd.f32 %v66, %v231
  %v292 = vadd.f32 %v67, %v236
  %v293 = vadd.f32 %v68, %v239
  %v294 = vadd.f32 %v69, %v244
  %v295 = vadd.f32 %v70, %v247
  %v296 = vadd.f32 %v71, %v252
  %v297 = vadd.f32 %v72, %v255
  %v298 = vadd.f32 %v73, %v260
  %v299 = vadd.f32 %v74, %v263
  %v300 = vadd.f32 %v75, %v268
  %v301 = vadd.f32 %v76, %v271
  %v302 = vadd.f32 %v77, %v276
  %v303 = vadd.f32 %v78, %v279
  %v304 = vadd.f32 %v79, %v284
  %v305 = vadd.f32 %v80, %v287
  %306 = vst [vmem:[#allocation2] sm:$0xff] %v290
  %307 = vst [vmem:[#allocation2 + $0x8] sm:$0xff] %v291
  %308 = vst [vmem:[#allocation2 + $0x10] sm:$0xff] %v292
  %309 = vst [vmem:[#allocation2 + $0x18] sm:$0xff] %v293
  %310 = vst [vmem:[#allocation2 + $0x20] sm:$0xff] %v294
  %311 = vst [vmem:[#allocation2 + $0x28] sm:$0xff] %v295
  %312 = vst [vmem:[#allocation2 + $0x30] sm:$0xff] %v296
  %313 = vst [vmem:[#allocation2 + $0x38] sm:$0xff] %v297
  %314 = vst [vmem:[#allocation2 + $0x40] sm:$0xff] %v298
  %315 = vst [vmem:[#allocation2 + $0x48] sm:$0xff] %v299
  %316 = vst [vmem:[#allocation2 + $0x50] sm:$0xff] %v300
  %317 = vst [vmem:[#allocation2 + $0x58] sm:$0xff] %v301
  %318 = vst [vmem:[#allocation2 + $0x60] sm:$0xff] %v302
  %319 = vst [vmem:[#allocation2 + $0x68] sm:$0xff] %v303
  %320 = vst [vmem:[#allocation2 + $0x70] sm:$0xff] %v304
  %321 = vst [vmem:[#allocation2 + $0x78] sm:$0xff] %v305
  // Predicated region
  $region30: #{gcn_block.1} parent=0 // pred_check
    %p322 = pneg %p24
  $region31: #{gcn_block.1} parent=0 // pred_check_branch
    %324 = sbr.rel (%p322) target = $region33
  $region32: #{gcn_block.1} parent=0 // pred_region
    %v325 = vld [vmem:[#allocation2] sm:$0xff]
    %v326 = vld [vmem:[#allocation2 + $0x8] sm:$0xff]
    %v327 = vld [vmem:[#allocation2 + $0x10] sm:$0xff]
    %v328 = vld [vmem:[#allocation2 + $0x18] sm:$0xff]
    %v329 = vld [vmem:[#allocation2 + $0x20] sm:$0xff]
    %v330 = vld [vmem:[#allocation2 + $0x28] sm:$0xff]
    %v331 = vld [vmem:[#allocation2 + $0x30] sm:$0xff]
    %v332 = vld [vmem:[#allocation2 + $0x38] sm:$0xff]
    %v333 = vld [vmem:[#allocation2 + $0x40] sm:$0xff]
    %v334 = vld [vmem:[#allocation2 + $0x48] sm:$0xff]
    %v335 = vld [vmem:[#allocation2 + $0x50] sm:$0xff]
    %v336 = vld [vmem:[#allocation2 + $0x58] sm:$0xff]
    %v337 = vld [vmem:[#allocation2 + $0x60] sm:$0xff]
    %v338 = vld [vmem:[#allocation2 + $0x68] sm:$0xff]
    %v339 = vld [vmem:[#allocation2 + $0x70] sm:$0xff]
    %v340 = vld [vmem:[#allocation2 + $0x78] sm:$0xff]
    %v341 = vld [vmem:[%s2] sm:$0xff]
    %v342 = vld [vmem:[%s2 + $0x8] sm:$0xff]
    %v343 = vld [vmem:[%s2 + $0x10] sm:$0xff]
    %v344 = vld [vmem:[%s2 + $0x18] sm:$0xff]
    %v345 = vld [vmem:[%s2 + $0x20] sm:$0xff]
    %v346 = vld [vmem:[%s2 + $0x28] sm:$0xff]
    %v347 = vld [vmem:[%s2 + $0x30] sm:$0xff]
    %v348 = vld [vmem:[%s2 + $0x38] sm:$0xff]
    %v349 = vld [vmem:[%s2 + $0x40] sm:$0xff]
    %v350 = vld [vmem:[%s2 + $0x48] sm:$0xff]
    %v351 = vld [vmem:[%s2 + $0x50] sm:$0xff]
    %v352 = vld [vmem:[%s2 + $0x58] sm:$0xff]
    %v353 = vld [vmem:[%s2 + $0x60] sm:$0xff]
    %v354 = vld [vmem:[%s2 + $0x68] sm:$0xff]
    %v355 = vld [vmem:[%s2 + $0x70] sm:$0xff]
    %v356 = vld [vmem:[%s2 + $0x78] sm:$0xff]
    %358 = vset.pattern.permute.xlu0 0
    %359 = vperm.xlu0 %358, %v341
    %v360 = vpop.permute.xlu0 %359
    %363 = vset.pattern.permute.xlu0 0
    %364 = vperm.xlu0 %363, %v342
    %v365 = vpop.permute.xlu0 %364
    %368 = vset.pattern.permute.xlu0 0
    %369 = vperm.xlu0 %368, %v343
    %v370 = vpop.permute.xlu0 %369
    %373 = vset.pattern.permute.xlu0 0
    %374 = vperm.xlu0 %373, %v344
    %v375 = vpop.permute.xlu0 %374
    %378 = vset.pattern.permute.xlu0 0
    %379 = vperm.xlu0 %378, %v345
    %v380 = vpop.permute.xlu0 %379
    %383 = vset.pattern.permute.xlu0 0
    %384 = vperm.xlu0 %383, %v346
    %v385 = vpop.permute.xlu0 %384
    %388 = vset.pattern.permute.xlu0 0
    %389 = vperm.xlu0 %388, %v347
    %v390 = vpop.permute.xlu0 %389
    %393 = vset.pattern.permute.xlu0 0
    %394 = vperm.xlu0 %393, %v348
    %v395 = vpop.permute.xlu0 %394
    %398 = vset.pattern.permute.xlu0 0
    %399 = vperm.xlu0 %398, %v349
    %v400 = vpop.permute.xlu0 %399
    %403 = vset.pattern.permute.xlu0 0
    %404 = vperm.xlu0 %403, %v350
    %v405 = vpop.permute.xlu0 %404
    %408 = vset.pattern.permute.xlu0 0
    %409 = vperm.xlu0 %408, %v351
    %v410 = vpop.permute.xlu0 %409
    %413 = vset.pattern.permute.xlu0 0
    %414 = vperm.xlu0 %413, %v352
    %v415 = vpop.permute.xlu0 %414
    %418 = vset.pattern.permute.xlu0 0
    %419 = vperm.xlu0 %418, %v353
    %v420 = vpop.permute.xlu0 %419
    %423 = vset.pattern.permute.xlu0 0
    %424 = vperm.xlu0 %423, %v354
    %v425 = vpop.permute.xlu0 %424
    %428 = vset.pattern.permute.xlu0 0
    %429 = vperm.xlu0 %428, %v355
    %v430 = vpop.permute.xlu0 %429
    %433 = vset.pattern.permute.xlu0 0
    %434 = vperm.xlu0 %433, %v356
    %v435 = vpop.permute.xlu0 %434
    %v437 = vmul.f32 %v325, %v360
    %v438 = vmul.f32 %v326, %v365
    %v439 = vmul.f32 %v327, %v370
    %v440 = vmul.f32 %v328, %v375
    %v441 = vmul.f32 %v329, %v380
    %v442 = vmul.f32 %v330, %v385
    %v443 = vmul.f32 %v331, %v390
    %v444 = vmul.f32 %v332, %v395
    %v445 = vmul.f32 %v333, %v400
    %v446 = vmul.f32 %v334, %v405
    %v447 = vmul.f32 %v335, %v410
    %v448 = vmul.f32 %v336, %v415
    %v449 = vmul.f32 %v337, %v420
    %v450 = vmul.f32 %v338, %v425
    %v451 = vmul.f32 %v339, %v430
    %v452 = vmul.f32 %v340, %v435
    %v453 = vld [vmem:[%s3] sm:$0xff]
    %v454 = vld [vmem:[%s3 + $0x8] sm:$0xff]
    %v455 = vld [vmem:[%s3 + $0x10] sm:$0xff]
    %v456 = vld [vmem:[%s3 + $0x18] sm:$0xff]
    %v457 = vld [vmem:[%s3 + $0x20] sm:$0xff]
    %v458 = vld [vmem:[%s3 + $0x28] sm:$0xff]
    %v459 = vld [vmem:[%s3 + $0x30] sm:$0xff]
    %v460 = vld [vmem:[%s3 + $0x38] sm:$0xff]
    %v461 = vld [vmem:[%s3 + $0x40] sm:$0xff]
    %v462 = vld [vmem:[%s3 + $0x48] sm:$0xff]
    %v463 = vld [vmem:[%s3 + $0x50] sm:$0xff]
    %v464 = vld [vmem:[%s3 + $0x58] sm:$0xff]
    %v465 = vld [vmem:[%s3 + $0x60] sm:$0xff]
    %v466 = vld [vmem:[%s3 + $0x68] sm:$0xff]
    %v467 = vld [vmem:[%s3 + $0x70] sm:$0xff]
    %v468 = vld [vmem:[%s3 + $0x78] sm:$0xff]
    %469 = vmatprep.subr.mxu0 0.0
    %470 = vmatpush1.msra.mxu0 %v468
    %471 = vmatprep.subr.mxu0 0.0
    %472 = vmatpush1.msra.mxu0 %v467
    %473 = vmatprep.subr.mxu0 0.0
    %474 = vmatpush1.msra.mxu0 %v466
    %475 = vmatprep.subr.mxu0 0.0
    %476 = vmatpush1.msra.mxu0 %v465
    %477 = vmatprep.subr.mxu0 0.0
    %478 = vmatpush1.msra.mxu0 %v464
    %479 = vmatprep.subr.mxu0 0.0
    %480 = vmatpush1.msra.mxu0 %v463
    %481 = vmatprep.subr.mxu0 0.0
    %482 = vmatpush1.msra.mxu0 %v462
    %483 = vmatprep.subr.mxu0 0.0
    %484 = vmatpush1.msra.mxu0 %v461
    %485 = vmatprep.subr.mxu0 0.0
    %486 = vmatpush1.msra.mxu0 %v460
    %487 = vmatprep.subr.mxu0 0.0
    %488 = vmatpush1.msra.mxu0 %v459
    %489 = vmatprep.subr.mxu0 0.0
    %490 = vmatpush1.msra.mxu0 %v458
    %491 = vmatprep.subr.mxu0 0.0
    %492 = vmatpush1.msra.mxu0 %v457
    %493 = vmatprep.subr.mxu0 0.0
    %494 = vmatpush1.msra.mxu0 %v456
    %495 = vmatprep.subr.mxu0 0.0
    %496 = vmatpush1.msra.mxu0 %v455
    %497 = vmatprep.subr.mxu0 0.0
    %498 = vmatpush1.msra.mxu0 %v454
    %499 = vmatprep.subr.mxu0 0.0
    %500 = vmatpush1.msra.mxu0 %v453
    %501 = vmatprep.subr.mxu0 0.0
    %502 = vmatpush2.msra.mxu0 0.0
    %503 = vmatprep.subr.mxu0 0.0
    %504 = vmatpush2.msra.mxu0 0.0
    %505 = vmatprep.subr.mxu0 0.0
    %506 = vmatpush2.msra.mxu0 0.0
    %507 = vmatprep.subr.mxu0 0.0
    %508 = vmatpush2.msra.mxu0 0.0
    %509 = vmatprep.subr.mxu0 0.0
    %510 = vmatpush2.msra.mxu0 0.0
    %511 = vmatprep.subr.mxu0 0.0
    %512 = vmatpush2.msra.mxu0 0.0
    %513 = vmatprep.subr.mxu0 0.0
    %514 = vmatpush2.msra.mxu0 0.0
    %515 = vmatprep.subr.mxu0 0.0
    %516 = vmatpush2.msra.mxu0 0.0
    %517 = vmatprep.subr.mxu0 0.0
    %518 = vmatpush2.msra.mxu0 0.0
    %519 = vmatprep.subr.mxu0 0.0
    %520 = vmatpush2.msra.mxu0 0.0
    %521 = vmatprep.subr.mxu0 0.0
    %522 = vmatpush2.msra.mxu0 0.0
    %523 = vmatprep.subr.mxu0 0.0
    %524 = vmatpush2.msra.mxu0 0.0
    %525 = vmatprep.subr.mxu0 0.0
    %526 = vmatpush2.msra.mxu0 0.0
    %527 = vmatprep.subr.mxu0 0.0
    %528 = vmatpush2.msra.mxu0 0.0
    %529 = vmatprep.subr.mxu0 0.0
    %530 = vmatpush2.msra.mxu0 0.0
    %531 = vmatprep.subr.mxu0 0.0
    %532 = vmatpush2.msra.mxu0 0.0
    %533 = vmatprep.mubr.f32.mxu0 0.0
    %534 = vmatmul.mubr.f32.gmra.mxu0 %v437
    %v535 = vpop.f32.mrf.mxu0
    %v536 = vadd.f32 0.0, %v535
    %v537 = vpop.f32.mrf.mxu0
    %538 = vmatprep.mubr.f32.mxu0 0.0
    %539 = vmatmul.mubr.f32.gmra.mxu0 %v438
    %v540 = vpop.f32.mrf.mxu0
    %v541 = vadd.f32 0.0, %v540
    %v542 = vpop.f32.mrf.mxu0
    %543 = vmatprep.mubr.f32.mxu0 0.0
    %544 = vmatmul.mubr.f32.gmra.mxu0 %v439
    %v545 = vpop.f32.mrf.mxu0
    %v546 = vadd.f32 0.0, %v545
    %v547 = vpop.f32.mrf.mxu0
    %548 = vmatprep.mubr.f32.mxu0 0.0
    %549 = vmatmul.mubr.f32.gmra.mxu0 %v440
    %v550 = vpop.f32.mrf.mxu0
    %v551 = vadd.f32 0.0, %v550
    %v552 = vpop.f32.mrf.mxu0
    %553 = vmatprep.mubr.f32.mxu0 0.0
    %554 = vmatmul.mubr.f32.gmra.mxu0 %v441
    %v555 = vpop.f32.mrf.mxu0
    %v556 = vadd.f32 0.0, %v555
    %v557 = vpop.f32.mrf.mxu0
    %558 = vmatprep.mubr.f32.mxu0 0.0
    %559 = vmatmul.mubr.f32.gmra.mxu0 %v442
    %v560 = vpop.f32.mrf.mxu0
    %v561 = vadd.f32 0.0, %v560
    %v562 = vpop.f32.mrf.mxu0
    %563 = vmatprep.mubr.f32.mxu0 0.0
    %564 = vmatmul.mubr.f32.gmra.mxu0 %v443
    %v565 = vpop.f32.mrf.mxu0
    %v566 = vadd.f32 0.0, %v565
    %v567 = vpop.f32.mrf.mxu0
    %568 = vmatprep.mubr.f32.mxu0 0.0
    %569 = vmatmul.mubr.f32.gmra.mxu0 %v444
    %v570 = vpop.f32.mrf.mxu0
    %v571 = vadd.f32 0.0, %v570
    %v572 = vpop.f32.mrf.mxu0
    %573 = vmatprep.mubr.f32.mxu0 0.0
    %574 = vmatmul.mubr.f32.gmra.mxu0 %v445
    %v575 = vpop.f32.mrf.mxu0
    %v576 = vadd.f32 0.0, %v575
    %v577 = vpop.f32.mrf.mxu0
    %578 = vmatprep.mubr.f32.mxu0 0.0
    %579 = vmatmul.mubr.f32.gmra.mxu0 %v446
    %v580 = vpop.f32.mrf.mxu0
    %v581 = vadd.f32 0.0, %v580
    %v582 = vpop.f32.mrf.mxu0
    %583 = vmatprep.mubr.f32.mxu0 0.0
    %584 = vmatmul.mubr.f32.gmra.mxu0 %v447
    %v585 = vpop.f32.mrf.mxu0
    %v586 = vadd.f32 0.0, %v585
    %v587 = vpop.f32.mrf.mxu0
    %588 = vmatprep.mubr.f32.mxu0 0.0
    %589 = vmatmul.mubr.f32.gmra.mxu0 %v448
    %v590 = vpop.f32.mrf.mxu0
    %v591 = vadd.f32 0.0, %v590
    %v592 = vpop.f32.mrf.mxu0
    %593 = vmatprep.mubr.f32.mxu0 0.0
    %594 = vmatmul.mubr.f32.gmra.mxu0 %v449
    %v595 = vpop.f32.mrf.mxu0
    %v596 = vadd.f32 0.0, %v595
    %v597 = vpop.f32.mrf.mxu0
    %598 = vmatprep.mubr.f32.mxu0 0.0
    %599 = vmatmul.mubr.f32.gmra.mxu0 %v450
    %v600 = vpop.f32.mrf.mxu0
    %v601 = vadd.f32 0.0, %v600
    %v602 = vpop.f32.mrf.mxu0
    %603 = vmatprep.mubr.f32.mxu0 0.0
    %604 = vmatmul.mubr.f32.gmra.mxu0 %v451
    %v605 = vpop.f32.mrf.mxu0
    %v606 = vadd.f32 0.0, %v605
    %v607 = vpop.f32.mrf.mxu0
    %608 = vmatprep.mubr.f32.mxu0 0.0
    %609 = vmatmul.mubr.f32.gmra.mxu0 %v452
    %v610 = vpop.f32.mrf.mxu0
    %v611 = vadd.f32 0.0, %v610
    %v612 = vpop.f32.mrf.mxu0
    %613 = vdwg.mxu0
    %v614 = vld [vmem:[%s4] sm:$0x1]
    %v616 = vlaneseq
    %v617 = vshrl.u32 %v616, 7
    %v618 = vsub.s32 0, %v617
    %v619 = vrot.slane %v614, %v618
    %v621 = vmul.f32 %v536, %v619
    %v622 = vmul.f32 %v541, %v619
    %v623 = vmul.f32 %v546, %v619
    %v624 = vmul.f32 %v551, %v619
    %v625 = vmul.f32 %v556, %v619
    %v626 = vmul.f32 %v561, %v619
    %v627 = vmul.f32 %v566, %v619
    %v628 = vmul.f32 %v571, %v619
    %v629 = vmul.f32 %v576, %v619
    %v630 = vmul.f32 %v581, %v619
    %v631 = vmul.f32 %v586, %v619
    %v632 = vmul.f32 %v591, %v619
    %v633 = vmul.f32 %v596, %v619
    %v634 = vmul.f32 %v601, %v619
    %v635 = vmul.f32 %v606, %v619
    %v636 = vmul.f32 %v611, %v619
    %v637 = vld [vmem:[%s5] sm:$0x1]
    %v639 = vlaneseq
    %v640 = vshrl.u32 %v639, 7
    %v641 = vsub.s32 0, %v640
    %v642 = vrot.slane %v637, %v641
    %v644 = vadd.f32 %v621, %v642
    %v645 = vadd.f32 %v622, %v642
    %v646 = vadd.f32 %v623, %v642
    %v647 = vadd.f32 %v624, %v642
    %v648 = vadd.f32 %v625, %v642
    %v649 = vadd.f32 %v626, %v642
    %v650 = vadd.f32 %v627, %v642
    %v651 = vadd.f32 %v628, %v642
    %v652 = vadd.f32 %v629, %v642
    %v653 = vadd.f32 %v630, %v642
    %v654 = vadd.f32 %v631, %v642
    %v655 = vadd.f32 %v632, %v642
    %v656 = vadd.f32 %v633, %v642
    %v657 = vadd.f32 %v634, %v642
    %v658 = vadd.f32 %v635, %v642
    %v659 = vadd.f32 %v636, %v642
    %v660 = vmax.f32 %v644, 0.0
    %v661 = vmax.f32 %v645, 0.0
    %v662 = vmax.f32 %v646, 0.0
    %v663 = vmax.f32 %v647, 0.0
    %v664 = vmax.f32 %v648, 0.0
    %v665 = vmax.f32 %v649, 0.0
    %v666 = vmax.f32 %v650, 0.0
    %v667 = vmax.f32 %v651, 0.0
    %v668 = vmax.f32 %v652, 0.0
    %v669 = vmax.f32 %v653, 0.0
    %v670 = vmax.f32 %v654, 0.0
    %v671 = vmax.f32 %v655, 0.0
    %v672 = vmax.f32 %v656, 0.0
    %v673 = vmax.f32 %v657, 0.0
    %v674 = vmax.f32 %v658, 0.0
    %v675 = vmax.f32 %v659, 0.0
    %676 = vst [vmem:[%s6] sm:$0xff] %v660
    %677 = vst [vmem:[%s6 + $0x8] sm:$0xff] %v661
    %678 = vst [vmem:[%s6 + $0x10] sm:$0xff] %v662
    %679 = vst [vmem:[%s6 + $0x18] sm:$0xff] %v663
    %680 = vst [vmem:[%s6 + $0x20] sm:$0xff] %v664
    %681 = vst [vmem:[%s6 + $0x28] sm:$0xff] %v665
    %682 = vst [vmem:[%s6 + $0x30] sm:$0xff] %v666
    %683 = vst [vmem:[%s6 + $0x38] sm:$0xff] %v667
    %684 = vst [vmem:[%s6 + $0x40] sm:$0xff] %v668
    %685 = vst [vmem:[%s6 + $0x48] sm:$0xff] %v669
    %686 = vst [vmem:[%s6 + $0x50] sm:$0xff] %v670
    %687 = vst [vmem:[%s6 + $0x58] sm:$0xff] %v671
    %688 = vst [vmem:[%s6 + $0x60] sm:$0xff] %v672
    %689 = vst [vmem:[%s6 + $0x68] sm:$0xff] %v673
    %690 = vst [vmem:[%s6 + $0x70] sm:$0xff] %v674
    %691 = vst [vmem:[%s6 + $0x78] sm:$0xff] %v675
  $region33: #{gcn_block.1} parent=0 // pred_fallthru
    _
  // Predicated region
  $region34: #{gcn_block.1} parent=0 // pred_check
    _
  $region35: #{gcn_block.1} parent=0 // pred_check_branch
    %693 = sbr.rel (0) target = $region37
  $region36: #{gcn_block.1} parent=0 // pred_region
    _
  $region37: #{gcn_block.1} parent=0 // pred_fallthru
    _
  // Predicated region
  $region38: #{gcn_block.1} parent=0 // pred_check
    _
  $region39: #{gcn_block.1} parent=0 // pred_check_branch
    %695 = sbr.rel (0) target = $region41
  $region40: #{gcn_block.1} parent=0 // pred_region
    _
  $region41: #{gcn_block.1} parent=0 // pred_fallthru
    _

</llo_original>
